<compile_context>
chip_gen: v7x
topology: tpu7x:2x2x1
jax: 0.10.0
libtpu: 0.0.40
codegen_flags: <defaults>
</compile_context>

<pallas_src>
import jax
import jax.numpy as jnp
from jax.experimental import pallas as pl
from jax.experimental.pallas import tpu as pltpu

_LANE = 128  # lane width of the lane-dense lin_pred output slab


def _round_up(x, m):
    return ((x + m - 1) // m) * m


def _tpu_generation():
    """Best-effort chip-generation sniff; falls back to conservative defaults."""
    try:
        kind = jax.devices()[0].device_kind.lower()
    except Exception:
        return "unknown"
    if "v7" in kind:
        return "v7x"
    if "v6" in kind:
        return "v6e"
    if "v5" in kind:
        return "v5e"
    return "unknown"


def _vmem_capacity_bytes(gen):
    try:
        return int(pltpu.get_tpu_info().vmem_capacity_bytes)
    except Exception:
        # Conservative fallbacks: 64 MiB/TC on v7x, 128 MiB on v5e/v6e.
        return (64 << 20) if gen == "v7x" else (128 << 20)


def _cox_pasnet_kernel(
    # streamed per-batch-tile inputs
    x1_ref, prebias_ref,
    # VMEM-resident weights / biases (constant index maps, single-buffered)
    w1_ref, b1_ref,
    w2_ref, b2_ref,
    w3_ref, b3_ref,
    w4a_ref,
    wd1_ref, bd1_ref,
    wd2_ref, bd2_ref,
    wd3_ref, bd3_ref,
    # outputs
    lin_ref, xd_ref,
):
    f32 = jnp.float32
    bf16 = jnp.bfloat16

    # Encoder (sc1 -> sc2 -> sc3). Training masks are already folded into the
    # weights in the wrapper. x1 arrives in bf16; MXU matmuls accumulate in
    # f32; bias add / tanh stay in f32.
    x = x1_ref[...]  # already bf16
    h = jnp.tanh(jnp.dot(x, w1_ref[...], preferred_element_type=f32) + b1_ref[...])
    h = jnp.tanh(jnp.dot(h.astype(bf16), w2_ref[...], preferred_element_type=f32) + b2_ref[...])
    code = jnp.tanh(jnp.dot(h.astype(bf16), w3_ref[...], preferred_element_type=f32) + b3_ref[...])

    # Decoder (dc1 -> dc2 -> dc3); dc3 has no activation.
    d = jnp.tanh(jnp.dot(code.astype(bf16), wd1_ref[...], preferred_element_type=f32) + bd1_ref[...])
    d = jnp.tanh(jnp.dot(d.astype(bf16), wd2_ref[...], preferred_element_type=f32) + bd2_ref[...])
    xd_ref[...] = (jnp.dot(d.astype(bf16), wd3_ref[...], preferred_element_type=f32)
                   + bd3_ref[...]).astype(xd_ref.dtype)

    # sc4 head: the N=1 matmul becomes a VPU multiply + lane reduction; the
    # 5-covariate contribution arrives as a precomputed per-row bias.
    lin = jnp.sum(code * w4a_ref[...], axis=-1, keepdims=True) + prebias_ref[...]
    # Lane-dense store (unmasked vst); wrapper slices [:, :1].
    lin_ref[...] = jnp.broadcast_to(lin, lin_ref.shape).astype(lin_ref.dtype)


def cox_pasnet_forward(x_1, x_2, x_3, x_4, x_5, x_6, params):
    """Full Cox_PASNet forward pass; the heavy work runs in one Pallas kernel.

    Call under jax.jit so the mask-fold / bf16 weight casts are fused and
    CSE'd across microbatches instead of re-streaming the weights every call.
    """
    f32, bf16 = jnp.float32, jnp.bfloat16
    batch, mirna = x_1.shape

    # --- Wrapper glue (plain XLA, negligible) -------------------------------
    # Fold per-feature masks into the weights: (x*m) @ W == x @ (diag(m) @ W).
    # Exact for the module's all-ones training masks (and any 0/1 mask).
    w1 = (params["w1"] * params["do_m1"][:, None]).astype(bf16)
    w2 = (params["w2"] * params["do_m2"][:, None]).astype(bf16)
    w3 = (params["w3"] * params["do_m3"][:, None]).astype(bf16)
    wd1 = params["wd1"].astype(bf16)
    wd2 = params["wd2"].astype(bf16)
    wd3 = params["wd3"].astype(bf16)
    b1, b2, b3 = params["b1"], params["b2"], params["b3"]
    bd1, bd2, bd3 = params["bd1"], params["bd2"], params["bd3"]
    w4a = params["w4a"].astype(f32)  # (1, Out_Nodes) row vector, VPU path

    # sc4 contribution of the 5 clinical covariates: a (B,5)x(5,1) dot in XLA.
    x_rest = jnp.concatenate([x_2, x_3, x_4, x_5, x_6], axis=1).astype(f32)
    prebias = x_rest @ params["w4b"].astype(f32)              # (B, 1)

    residents = (w1, b1, w2, b2, w3, b3, w4a, wd1, bd1, wd2, bd2, wd3, bd3)
    weight_bytes = sum(int(a.size) * a.dtype.itemsize for a in residents)

    # --- Generation-aware batch tiling & VMEM budget ------------------------
    gen = _tpu_generation()
    vmem_cap = _vmem_capacity_bytes(gen)
    # >=16 MiB headroom on v7x (64 MiB/TC), ~25% headroom elsewhere.
    usable_vmem = min(vmem_cap - (16 << 20), int(0.75 * vmem_cap))

    def _stream_bytes(tb):
        # x1 (bf16) + prebias (f32) streamed in; lin slab + x_d (f32) streamed
        # out; all double-buffered by the Pallas pipeline.
        per_step = tb * mirna * 2 + tb * 1 * 4 + tb * _LANE * 4 + tb * mirna * 4
        return 2 * per_step

    if weight_bytes + _stream_bytes(8) > usable_vmem:
        # TODO(synk): gene-scale w1/wd3 do not fit VMEM-resident; add a trailing
        # "arbitrary" grid axis that K-tiles sc1 and N-tiles dc3 (f32 scratch
        # accumulator + pl.when init/finalize) instead of failing here.
        raise NotImplementedError(
            "Cox_PASNet weights exceed the usable VMEM budget "
            f"({weight_bytes} B resident > {usable_vmem} B usable); the "
            "K/N-tiled fallback path is not implemented.")

    # MXU-shape-aware tile cap: 256 fills v6e/v7x's 256x256 MXU; 128 on v5e.
    tb_cap = 256 if gen in ("v6e", "v7x") else 128
    tb = min(tb_cap, _round_up(batch, 8))
    if gen == "v7x" and batch >= 16:
        # Two TensorCores per chip: keep >=2 "parallel" grid steps so both
        # cores get work for small/medium batches.
        tb = min(tb, _round_up((batch + 1) // 2, 8))
    while weight_bytes + _stream_bytes(tb) > usable_vmem and tb > 8:
        tb = max(8, _round_up(tb // 2, 8))
    need_bytes = weight_bytes + _stream_bytes(tb)

    padded_batch = _round_up(batch, tb)
    pad = padded_batch - batch
    # Ship x1 in bf16 (kernel already multiplies in bf16 on the MXU).
    x1p = jnp.pad(x_1.astype(bf16), ((0, pad), (0, 0)))
    prebias_p = jnp.pad(prebias, ((0, pad), (0, 0)))
    grid = (padded_batch // tb,)

    def _tiled(feat):
        return pl.BlockSpec((tb, feat), lambda i: (i, 0))

    def _resident(arr):
        # Constant index map -> never re-DMA'd across grid steps; Buffered(1)
        # drops the useless second pipeline buffer (halves resident VMEM).
        return pl.BlockSpec(arr.shape, lambda i: (0,) * arr.ndim,
                            pipeline_mode=pl.Buffered(1))

    inputs = (x1p, prebias_p) + residents
    in_specs = [_tiled(mirna), _tiled(1)] + [_resident(a) for a in residents]

    out_shape = (
        jax.ShapeDtypeStruct((padded_batch, _LANE), f32),   # lane-dense lin slab
        # x_d stays f32 to preserve the module's output dtype; switch this (and
        # the xd_ref store) to bf16 if downstream math tolerates it.
        jax.ShapeDtypeStruct((padded_batch, mirna), f32),
    )
    out_specs = (_tiled(_LANE), _tiled(mirna))

    # Generation-aware scoped-VMEM limit: ~48 MiB cap on v7x, up to ~100 MiB on
    # v5e/v6e; never below 32 MiB and always >= the computed footprint.
    vmem_ceiling = (48 << 20) if gen == "v7x" else (100 << 20)
    vmem_limit = int(max(32 << 20, min(need_bytes + (8 << 20), vmem_ceiling)))

    lin_pad, x_d = pl.pallas_call(
        _cox_pasnet_kernel,
        out_shape=out_shape,
        grid_spec=pltpu.PrefetchScalarGridSpec(
            num_scalar_prefetch=0,
            grid=grid,
            in_specs=in_specs,
            out_specs=out_specs,
        ),
        compiler_params=pltpu.CompilerParams(
            dimension_semantics=("parallel",),
            vmem_limit_bytes=vmem_limit,
        ),
    )(*inputs)

    return lin_pad[:batch, :1], x_d[:batch]


def init_params(key, mirna_nodes, hidden1, hidden2, out_nodes):
    """Parameter init mirroring nn.Linear defaults; weights stored (in, out)."""
    def linear(k, fan_in, fan_out):
        kw, kb = jax.random.split(k)
        bound = 1.0 / jnp.sqrt(jnp.float32(fan_in))
        w = jax.random.uniform(kw, (fan_in, fan_out), jnp.float32, -bound, bound)
        b = jax.random.uniform(kb, (1, fan_out), jnp.float32, -bound, bound)
        return w, b

    keys = jax.random.split(key, 7)
    w1, b1 = linear(keys[0], mirna_nodes, hidden1)
    w2, b2 = linear(keys[1], hidden1, hidden2)
    w3, b3 = linear(keys[2], hidden2, out_nodes)
    wd1, bd1 = linear(keys[3], out_nodes, hidden2)
    wd2, bd2 = linear(keys[4], hidden2, hidden1)
    wd3, bd3 = linear(keys[5], hidden1, mirna_nodes)
    w4 = jax.random.uniform(keys[6], (out_nodes + 5, 1), jnp.float32, -0.001, 0.001)

    return {
        "w1": w1, "b1": b1, "w2": w2, "b2": b2, "w3": w3, "b3": b3,
        "w4a": w4[:out_nodes, :].T,   # (1, Out_Nodes) row vector for the VPU head
        "w4b": w4[out_nodes:, :],     # (5, 1) applied to the covariates in XLA
        "wd1": wd1, "bd1": bd1, "wd2": wd2, "bd2": bd2, "wd3": wd3, "bd3": bd3,
        # training-mode per-feature masks (all ones, as in the module)
        "do_m1": jnp.ones((mirna_nodes,), jnp.float32),
        "do_m2": jnp.ones((hidden1,), jnp.float32),
        "do_m3": jnp.ones((hidden2,), jnp.float32),
    }


def _reference_forward(x_1, x_2, x_3, x_4, x_5, x_6, p):
    """Pure-JAX reference mirroring the kernel's bf16-matmul / f32-accum math."""
    f32, bf16 = jnp.float32, jnp.bfloat16

    def dense(x, w, b):
        return jnp.dot(x.astype(bf16), w.astype(bf16), preferred_element_type=f32) + b

    x = x_1 * p["do_m1"][None, :]
    h = jnp.tanh(dense(x, p["w1"], p["b1"]))
    h = h * p["do_m2"][None, :]
    h = jnp.tanh(dense(h, p["w2"], p["b2"]))
    h = h * p["do_m3"][None, :]
    code = jnp.tanh(dense(h, p["w3"], p["b3"]))
    d = jnp.tanh(dense(code, p["wd1"], p["bd1"]))
    d = jnp.tanh(dense(d, p["wd2"], p["bd2"]))
    x_d = dense(d, p["wd3"], p["bd3"])
    x_rest = jnp.concatenate([x_2, x_3, x_4, x_5, x_6], axis=1)
    lin = jnp.sum(code * p["w4a"], axis=-1, keepdims=True) + x_rest @ p["w4b"]
    return lin, x_d


if __name__ == "__main__":
    # Small shapes consistent with the module's forward:
    #   x_1: (batch, MiRNA_Nodes); x_2..x_6: (batch, 1) clinical covariates.
    MiRNA_Nodes, Hidden1, Hidden2, Out_Nodes = 32, 16, 16, 8
    batch = 4

    key = jax.random.PRNGKey(0)
    k_params, k1, k2, k3, k4, k5, k6 = jax.random.split(key, 7)

    params = init_params(k_params, MiRNA_Nodes, Hidden1, Hidden2, Out_Nodes)

    x_1 = jax.random.normal(k1, (batch, MiRNA_Nodes), jnp.float32)
    x_2 = jax.random.normal(k2, (batch, 1), jnp.float32)
    x_3 = jax.random.normal(k3, (batch, 1), jnp.float32)
    x_4 = jax.random.normal(k4, (batch, 1), jnp.float32)
    x_5 = jax.random.normal(k5, (batch, 1), jnp.float32)
    x_6 = jax.random.normal(k6, (batch, 1), jnp.float32)

    fwd = jax.jit(cox_pasnet_forward)
    lin_pred, x_d = fwd(x_1, x_2, x_3, x_4, x_5, x_6, params)
    jax.block_until_ready((lin_pred, x_d))

    # Correctness check against a pure-JAX reference (bf16 matmuls, f32 accum).
    ref_lin, ref_xd = _reference_forward(x_1, x_2, x_3, x_4, x_5, x_6, params)
    assert lin_pred.shape == (batch, 1) and x_d.shape == (batch, MiRNA_Nodes)
    assert jnp.allclose(lin_pred, ref_lin, atol=2e-2, rtol=2e-2)
    assert jnp.allclose(x_d, ref_xd, atol=2e-2, rtol=2e-2)

    print("KERNEL_OK")
</pallas_src>

<mosaic_0001>
module attributes {stable_mosaic.version = 11 : i64} {
  func.func @_cox_pasnet_kernel(%arg0: i32, %arg1: memref<8x32xbf16, #tpu.memory_space<vmem>>, %arg2: memref<8x1xf32, #tpu.memory_space<vmem>>, %arg3: memref<32x16xbf16, #tpu.memory_space<vmem>>, %arg4: memref<1x16xf32, #tpu.memory_space<vmem>>, %arg5: memref<16x16xbf16, #tpu.memory_space<vmem>>, %arg6: memref<1x16xf32, #tpu.memory_space<vmem>>, %arg7: memref<16x8xbf16, #tpu.memory_space<vmem>>, %arg8: memref<1x8xf32, #tpu.memory_space<vmem>>, %arg9: memref<1x8xf32, #tpu.memory_space<vmem>>, %arg10: memref<8x16xbf16, #tpu.memory_space<vmem>>, %arg11: memref<1x16xf32, #tpu.memory_space<vmem>>, %arg12: memref<16x16xbf16, #tpu.memory_space<vmem>>, %arg13: memref<1x16xf32, #tpu.memory_space<vmem>>, %arg14: memref<16x32xbf16, #tpu.memory_space<vmem>>, %arg15: memref<1x32xf32, #tpu.memory_space<vmem>>, %arg16: memref<8x128xf32, #tpu.memory_space<vmem>>, %arg17: memref<8x32xf32, #tpu.memory_space<vmem>>) attributes {dimension_semantics = [#tpu.dimension_semantics<parallel>], iteration_bounds = array<i64: 1>, scalar_prefetch = 0 : i64, scratch_operands = 0 : i64, tpu.core_type = #tpu.core_type<tc>, window_params = [{transform_indices = @transform_0, window_bounds = array<i64: 8, 32>}, {transform_indices = @transform_1, window_bounds = array<i64: 8, 1>}, {pipeline_mode = #tpu.pipeline_mode<synchronous>, transform_indices = @transform_2, window_bounds = array<i64: 32, 16>}, {pipeline_mode = #tpu.pipeline_mode<synchronous>, transform_indices = @transform_3, window_bounds = array<i64: 1, 16>}, {pipeline_mode = #tpu.pipeline_mode<synchronous>, transform_indices = @transform_4, window_bounds = array<i64: 16, 16>}, {pipeline_mode = #tpu.pipeline_mode<synchronous>, transform_indices = @transform_5, window_bounds = array<i64: 1, 16>}, {pipeline_mode = #tpu.pipeline_mode<synchronous>, transform_indices = @transform_6, window_bounds = array<i64: 16, 8>}, {pipeline_mode = #tpu.pipeline_mode<synchronous>, transform_indices = @transform_7, window_bounds = array<i64: 1, 8>}, {pipeline_mode = #tpu.pipeline_mode<synchronous>, transform_indices = @transform_8, window_bounds = array<i64: 1, 8>}, {pipeline_mode = #tpu.pipeline_mode<synchronous>, transform_indices = @transform_9, window_bounds = array<i64: 8, 16>}, {pipeline_mode = #tpu.pipeline_mode<synchronous>, transform_indices = @transform_10, window_bounds = array<i64: 1, 16>}, {pipeline_mode = #tpu.pipeline_mode<synchronous>, transform_indices = @transform_11, window_bounds = array<i64: 16, 16>}, {pipeline_mode = #tpu.pipeline_mode<synchronous>, transform_indices = @transform_12, window_bounds = array<i64: 1, 16>}, {pipeline_mode = #tpu.pipeline_mode<synchronous>, transform_indices = @transform_13, window_bounds = array<i64: 16, 32>}, {pipeline_mode = #tpu.pipeline_mode<synchronous>, transform_indices = @transform_14, window_bounds = array<i64: 1, 32>}, {transform_indices = @transform_15, window_bounds = array<i64: 8, 128>}, {transform_indices = @transform_16, window_bounds = array<i64: 8, 32>}]} {
    %c0 = arith.constant 0 : index
    %c0_0 = arith.constant 0 : index
    %0 = vector.load %arg1[%c0, %c0_0] : memref<8x32xbf16, #tpu.memory_space<vmem>>, vector<8x32xbf16>
    %c0_1 = arith.constant 0 : index
    %c0_2 = arith.constant 0 : index
    %1 = vector.load %arg3[%c0_1, %c0_2] : memref<32x16xbf16, #tpu.memory_space<vmem>>, vector<32x16xbf16>
    %cst = arith.constant dense<0.000000e+00> : vector<8x16xf32>
    %2 = tpu.matmul %0, %1, %cst {dimension_numbers = #tpu.dot_dimension_numbers<[1], [0], [0], [1], [0, 0, 1, 1], [], []>} : vector<8x32xbf16>, vector<32x16xbf16>, vector<8x16xf32> -> vector<8x16xf32>
    %c0_3 = arith.constant 0 : index
    %c0_4 = arith.constant 0 : index
    %3 = vector.load %arg4[%c0_3, %c0_4] : memref<1x16xf32, #tpu.memory_space<vmem>>, vector<1x16xf32>
    %4 = vector.broadcast %3 : vector<1x16xf32> to vector<8x16xf32>
    %5 = arith.addf %2, %4 : vector<8x16xf32>
    %6 = math.tanh %5 : vector<8x16xf32>
    %7 = arith.truncf %6 : vector<8x16xf32> to vector<8x16xbf16>
    %c0_5 = arith.constant 0 : index
    %c0_6 = arith.constant 0 : index
    %8 = vector.load %arg5[%c0_5, %c0_6] : memref<16x16xbf16, #tpu.memory_space<vmem>>, vector<16x16xbf16>
    %cst_7 = arith.constant dense<0.000000e+00> : vector<8x16xf32>
    %9 = tpu.matmul %7, %8, %cst_7 {dimension_numbers = #tpu.dot_dimension_numbers<[1], [0], [0], [1], [0, 0, 1, 1], [], []>} : vector<8x16xbf16>, vector<16x16xbf16>, vector<8x16xf32> -> vector<8x16xf32>
    %c0_8 = arith.constant 0 : index
    %c0_9 = arith.constant 0 : index
    %10 = vector.load %arg6[%c0_8, %c0_9] : memref<1x16xf32, #tpu.memory_space<vmem>>, vector<1x16xf32>
    %11 = vector.broadcast %10 : vector<1x16xf32> to vector<8x16xf32>
    %12 = arith.addf %9, %11 : vector<8x16xf32>
    %13 = math.tanh %12 : vector<8x16xf32>
    %14 = arith.truncf %13 : vector<8x16xf32> to vector<8x16xbf16>
    %c0_10 = arith.constant 0 : index
    %c0_11 = arith.constant 0 : index
    %15 = vector.load %arg7[%c0_10, %c0_11] : memref<16x8xbf16, #tpu.memory_space<vmem>>, vector<16x8xbf16>
    %cst_12 = arith.constant dense<0.000000e+00> : vector<8x8xf32>
    %16 = tpu.matmul %14, %15, %cst_12 {dimension_numbers = #tpu.dot_dimension_numbers<[1], [0], [0], [1], [0, 0, 1, 1], [], []>} : vector<8x16xbf16>, vector<16x8xbf16>, vector<8x8xf32> -> vector<8x8xf32>
    %c0_13 = arith.constant 0 : index
    %c0_14 = arith.constant 0 : index
    %17 = vector.load %arg8[%c0_13, %c0_14] : memref<1x8xf32, #tpu.memory_space<vmem>>, vector<1x8xf32>
    %18 = vector.broadcast %17 : vector<1x8xf32> to vector<8x8xf32>
    %19 = arith.addf %16, %18 : vector<8x8xf32>
    %20 = math.tanh %19 : vector<8x8xf32>
    %21 = arith.truncf %20 : vector<8x8xf32> to vector<8x8xbf16>
    %c0_15 = arith.constant 0 : index
    %c0_16 = arith.constant 0 : index
    %22 = vector.load %arg10[%c0_15, %c0_16] : memref<8x16xbf16, #tpu.memory_space<vmem>>, vector<8x16xbf16>
    %cst_17 = arith.constant dense<0.000000e+00> : vector<8x16xf32>
    %23 = tpu.matmul %21, %22, %cst_17 {dimension_numbers = #tpu.dot_dimension_numbers<[1], [0], [0], [1], [0, 0, 1, 1], [], []>} : vector<8x8xbf16>, vector<8x16xbf16>, vector<8x16xf32> -> vector<8x16xf32>
    %c0_18 = arith.constant 0 : index
    %c0_19 = arith.constant 0 : index
    %24 = vector.load %arg11[%c0_18, %c0_19] : memref<1x16xf32, #tpu.memory_space<vmem>>, vector<1x16xf32>
    %25 = vector.broadcast %24 : vector<1x16xf32> to vector<8x16xf32>
    %26 = arith.addf %23, %25 : vector<8x16xf32>
    %27 = math.tanh %26 : vector<8x16xf32>
    %28 = arith.truncf %27 : vector<8x16xf32> to vector<8x16xbf16>
    %c0_20 = arith.constant 0 : index
    %c0_21 = arith.constant 0 : index
    %29 = vector.load %arg12[%c0_20, %c0_21] : memref<16x16xbf16, #tpu.memory_space<vmem>>, vector<16x16xbf16>
    %cst_22 = arith.constant dense<0.000000e+00> : vector<8x16xf32>
    %30 = tpu.matmul %28, %29, %cst_22 {dimension_numbers = #tpu.dot_dimension_numbers<[1], [0], [0], [1], [0, 0, 1, 1], [], []>} : vector<8x16xbf16>, vector<16x16xbf16>, vector<8x16xf32> -> vector<8x16xf32>
    %c0_23 = arith.constant 0 : index
    %c0_24 = arith.constant 0 : index
    %31 = vector.load %arg13[%c0_23, %c0_24] : memref<1x16xf32, #tpu.memory_space<vmem>>, vector<1x16xf32>
    %32 = vector.broadcast %31 : vector<1x16xf32> to vector<8x16xf32>
    %33 = arith.addf %30, %32 : vector<8x16xf32>
    %34 = math.tanh %33 : vector<8x16xf32>
    %35 = arith.truncf %34 : vector<8x16xf32> to vector<8x16xbf16>
    %c0_25 = arith.constant 0 : index
    %c0_26 = arith.constant 0 : index
    %36 = vector.load %arg14[%c0_25, %c0_26] : memref<16x32xbf16, #tpu.memory_space<vmem>>, vector<16x32xbf16>
    %cst_27 = arith.constant dense<0.000000e+00> : vector<8x32xf32>
    %37 = tpu.matmul %35, %36, %cst_27 {dimension_numbers = #tpu.dot_dimension_numbers<[1], [0], [0], [1], [0, 0, 1, 1], [], []>} : vector<8x16xbf16>, vector<16x32xbf16>, vector<8x32xf32> -> vector<8x32xf32>
    %c0_28 = arith.constant 0 : index
    %c0_29 = arith.constant 0 : index
    %38 = vector.load %arg15[%c0_28, %c0_29] : memref<1x32xf32, #tpu.memory_space<vmem>>, vector<1x32xf32>
    %39 = vector.broadcast %38 : vector<1x32xf32> to vector<8x32xf32>
    %40 = arith.addf %37, %39 : vector<8x32xf32>
    %c0_30 = arith.constant 0 : index
    %c0_31 = arith.constant 0 : index
    %41 = vector.load %arg17[%c0_30, %c0_31] : memref<8x32xf32, #tpu.memory_space<vmem>>, vector<8x32xf32>
    tpu.vector_store %arg17[%c0_30, %c0_31], %40 {strides = array<i32>} : memref<8x32xf32, #tpu.memory_space<vmem>>, vector<8x32xf32>,
    %c0_32 = arith.constant 0 : index
    %c0_33 = arith.constant 0 : index
    %42 = vector.load %arg9[%c0_32, %c0_33] : memref<1x8xf32, #tpu.memory_space<vmem>>, vector<1x8xf32>
    %43 = vector.broadcast %42 : vector<1x8xf32> to vector<8x8xf32>
    %44 = arith.mulf %20, %43 : vector<8x8xf32>
    %cst_34 = arith.constant dense<0.000000e+00> : vector<8xf32>
    %45 = vector.multi_reduction <add>, %44, %cst_34 [1] : vector<8x8xf32> to vector<8xf32>
    %46 = vector.shape_cast %45 : vector<8xf32> to vector<8x1xf32>
    %c0_35 = arith.constant 0 : index
    %c0_36 = arith.constant 0 : index
    %47 = vector.load %arg2[%c0_35, %c0_36] : memref<8x1xf32, #tpu.memory_space<vmem>>, vector<8x1xf32>
    %48 = arith.addf %46, %47 : vector<8x1xf32>
    %49 = vector.shape_cast %48 : vector<8x1xf32> to vector<8x1xf32>
    %50 = vector.broadcast %49 : vector<8x1xf32> to vector<8x128xf32>
    %c0_37 = arith.constant 0 : index
    %c0_38 = arith.constant 0 : index
    %51 = vector.load %arg16[%c0_37, %c0_38] : memref<8x128xf32, #tpu.memory_space<vmem>>, vector<8x128xf32>
    tpu.vector_store %arg16[%c0_37, %c0_38], %50 {strides = array<i32>} : memref<8x128xf32, #tpu.memory_space<vmem>>, vector<8x128xf32>,
    return
  }
  func.func @transform_0(%arg0: i32) -> (i32, i32) {
    %c0_i32 = arith.constant 0 : i32
    %c0_i32_0 = arith.constant 0 : i32
    return %arg0, %c0_i32 : i32, i32
  }
  func.func @transform_1(%arg0: i32) -> (i32, i32) {
    %c0_i32 = arith.constant 0 : i32
    %c0_i32_0 = arith.constant 0 : i32
    return %arg0, %c0_i32 : i32, i32
  }
  func.func @transform_2(%arg0: i32) -> (i32, i32) {
    %c0_i32 = arith.constant 0 : i32
    %c0_i32_0 = arith.constant 0 : i32
    %c0_i32_1 = arith.constant 0 : i32
    return %c0_i32, %c0_i32_0 : i32, i32
  }
  func.func @transform_3(%arg0: i32) -> (i32, i32) {
    %c0_i32 = arith.constant 0 : i32
    %c0_i32_0 = arith.constant 0 : i32
    %c0_i32_1 = arith.constant 0 : i32
    return %c0_i32, %c0_i32_0 : i32, i32
  }
  func.func @transform_4(%arg0: i32) -> (i32, i32) {
    %c0_i32 = arith.constant 0 : i32
    %c0_i32_0 = arith.constant 0 : i32
    %c0_i32_1 = arith.constant 0 : i32
    return %c0_i32, %c0_i32_0 : i32, i32
  }
  func.func @transform_5(%arg0: i32) -> (i32, i32) {
    %c0_i32 = arith.constant 0 : i32
    %c0_i32_0 = arith.constant 0 : i32
    %c0_i32_1 = arith.constant 0 : i32
    return %c0_i32, %c0_i32_0 : i32, i32
  }
  func.func @transform_6(%arg0: i32) -> (i32, i32) {
    %c0_i32 = arith.constant 0 : i32
    %c0_i32_0 = arith.constant 0 : i32
    %c0_i32_1 = arith.constant 0 : i32
    return %c0_i32, %c0_i32_0 : i32, i32
  }
  func.func @transform_7(%arg0: i32) -> (i32, i32) {
    %c0_i32 = arith.constant 0 : i32
    %c0_i32_0 = arith.constant 0 : i32
    %c0_i32_1 = arith.constant 0 : i32
    return %c0_i32, %c0_i32_0 : i32, i32
  }
  func.func @transform_8(%arg0: i32) -> (i32, i32) {
    %c0_i32 = arith.constant 0 : i32
    %c0_i32_0 = arith.constant 0 : i32
    %c0_i32_1 = arith.constant 0 : i32
    return %c0_i32, %c0_i32_0 : i32, i32
  }
  func.func @transform_9(%arg0: i32) -> (i32, i32) {
    %c0_i32 = arith.constant 0 : i32
    %c0_i32_0 = arith.constant 0 : i32
    %c0_i32_1 = arith.constant 0 : i32
    return %c0_i32, %c0_i32_0 : i32, i32
  }
  func.func @transform_10(%arg0: i32) -> (i32, i32) {
    %c0_i32 = arith.constant 0 : i32
    %c0_i32_0 = arith.constant 0 : i32
    %c0_i32_1 = arith.constant 0 : i32
    return %c0_i32, %c0_i32_0 : i32, i32
  }
  func.func @transform_11(%arg0: i32) -> (i32, i32) {
    %c0_i32 = arith.constant 0 : i32
    %c0_i32_0 = arith.constant 0 : i32
    %c0_i32_1 = arith.constant 0 : i32
    return %c0_i32, %c0_i32_0 : i32, i32
  }
  func.func @transform_12(%arg0: i32) -> (i32, i32) {
    %c0_i32 = arith.constant 0 : i32
    %c0_i32_0 = arith.constant 0 : i32
    %c0_i32_1 = arith.constant 0 : i32
    return %c0_i32, %c0_i32_0 : i32, i32
  }
  func.func @transform_13(%arg0: i32) -> (i32, i32) {
    %c0_i32 = arith.constant 0 : i32
    %c0_i32_0 = arith.constant 0 : i32
    %c0_i32_1 = arith.constant 0 : i32
    return %c0_i32, %c0_i32_0 : i32, i32
  }
  func.func @transform_14(%arg0: i32) -> (i32, i32) {
    %c0_i32 = arith.constant 0 : i32
    %c0_i32_0 = arith.constant 0 : i32
    %c0_i32_1 = arith.constant 0 : i32
    return %c0_i32, %c0_i32_0 : i32, i32
  }
  func.func @transform_15(%arg0: i32) -> (i32, i32) {
    %c0_i32 = arith.constant 0 : i32
    %c0_i32_0 = arith.constant 0 : i32
    return %arg0, %c0_i32 : i32, i32
  }
  func.func @transform_16(%arg0: i32) -> (i32, i32) {
    %c0_i32 = arith.constant 0 : i32
    %c0_i32_0 = arith.constant 0 : i32
    return %arg0, %c0_i32 : i32, i32
  }
}

</mosaic_0001>

<llo_original>
// kernel: cox_pasnet_forward.1
$region0: #{cox_pasnet_forward.1}
  #allocation0 [shape = 'u32[]', space=smem, size = 0x4, offset = 0x4, fixed_abs, tag = 'smem constant byte address 0x4 - core index']
  #allocation1 [shape = 'u32[144,128]{1,0:T(1,128)}', space=vmem, size = 0x12000, scoped, tag = 'internal scratch']
  %s0 = inlined_call_operand.vmem [shape: bf16[8,32], index: 0, kind: input, shape index: {}]
  %s1 = inlined_call_operand.vmem [shape: f32[8,1], index: 1, kind: input, shape index: {}]
  %s2 = inlined_call_operand.vmem [shape: bf16[32,16], index: 2, kind: input, shape index: {}]
  %s3 = inlined_call_operand.vmem [shape: f32[1,16], index: 3, kind: input, shape index: {}]
  %s4 = inlined_call_operand.vmem [shape: bf16[16,16], index: 4, kind: input, shape index: {}]
  %s5 = inlined_call_operand.vmem [shape: f32[1,16], index: 5, kind: input, shape index: {}]
  %s6 = inlined_call_operand.vmem [shape: bf16[16,8], index: 6, kind: input, shape index: {}]
  %s7 = inlined_call_operand.vmem [shape: f32[1,8], index: 7, kind: input, shape index: {}]
  %s8 = inlined_call_operand.vmem [shape: f32[1,8], index: 8, kind: input, shape index: {}]
  %s9 = inlined_call_operand.vmem [shape: bf16[8,16], index: 9, kind: input, shape index: {}]
  %s10 = inlined_call_operand.vmem [shape: f32[1,16], index: 10, kind: input, shape index: {}]
  %s11 = inlined_call_operand.vmem [shape: bf16[16,16], index: 11, kind: input, shape index: {}]
  %s12 = inlined_call_operand.vmem [shape: f32[1,16], index: 12, kind: input, shape index: {}]
  %s13 = inlined_call_operand.vmem [shape: bf16[16,32], index: 13, kind: input, shape index: {}]
  %s14 = inlined_call_operand.vmem [shape: f32[1,32], index: 14, kind: input, shape index: {}]
  %s15 = inlined_call_operand.vmem [shape: f32[8,128], index: 15, kind: output, shape index: {0}]
  %s16 = inlined_call_operand.vmem [shape: f32[8,32], index: 16, kind: output, shape index: {1}]
  %17 = xla_tuple %s15, %s16
  %s18 = sld [smem:[#allocation0]]
  $region78: #{cox_pasnet_forward.1} parent=0
    _
  %s20 = ssub.s32 1, %s18
  %s21 = scalar_select 0, %s20, %s18
  // Predicated region
  $region2: #{cox_pasnet_forward.1} parent=0 // pred_check
    _
  $region3: #{cox_pasnet_forward.1} parent=0 // pred_check_branch
    %23 = sbr.rel (0) target = $region5
  $region4: #{cox_pasnet_forward.1} parent=0 // pred_region
    _
  $region5: #{cox_pasnet_forward.1} parent=0 // pred_fallthru
    _
  // Predicated region
  $region6: #{cox_pasnet_forward.1} parent=0 // pred_check
    _
  $region7: #{cox_pasnet_forward.1} parent=0 // pred_check_branch
    %25 = sbr.rel (0) target = $region9
  $region8: #{cox_pasnet_forward.1} parent=0 // pred_region
    _
  $region9: #{cox_pasnet_forward.1} parent=0 // pred_fallthru
    _
  // Predicated region
  $region10: #{cox_pasnet_forward.1} parent=0 // pred_check
    _
  $region11: #{cox_pasnet_forward.1} parent=0 // pred_check_branch
    %27 = sbr.rel (0) target = $region13
  $region12: #{cox_pasnet_forward.1} parent=0 // pred_region
    _
  $region13: #{cox_pasnet_forward.1} parent=0 // pred_fallthru
    _
  // Predicated region
  $region14: #{cox_pasnet_forward.1} parent=0 // pred_check
    _
  $region15: #{cox_pasnet_forward.1} parent=0 // pred_check_branch
    %29 = sbr.rel (0) target = $region17
  $region16: #{cox_pasnet_forward.1} parent=0 // pred_region
    _
  $region17: #{cox_pasnet_forward.1} parent=0 // pred_fallthru
    _
  // Predicated region
  $region18: #{cox_pasnet_forward.1} parent=0 // pred_check
    _
  $region19: #{cox_pasnet_forward.1} parent=0 // pred_check_branch
    %31 = sbr.rel (0) target = $region21
  $region20: #{cox_pasnet_forward.1} parent=0 // pred_region
    _
  $region21: #{cox_pasnet_forward.1} parent=0 // pred_fallthru
    _
  // Predicated region
  $region22: #{cox_pasnet_forward.1} parent=0 // pred_check
    _
  $region23: #{cox_pasnet_forward.1} parent=0 // pred_check_branch
    %33 = sbr.rel (0) target = $region25
  $region24: #{cox_pasnet_forward.1} parent=0 // pred_region
    _
  $region25: #{cox_pasnet_forward.1} parent=0 // pred_fallthru
    _
  // Predicated region
  $region26: #{cox_pasnet_forward.1} parent=0 // pred_check
    _
  $region27: #{cox_pasnet_forward.1} parent=0 // pred_check_branch
    %35 = sbr.rel (0) target = $region29
  $region28: #{cox_pasnet_forward.1} parent=0 // pred_region
    _
  $region29: #{cox_pasnet_forward.1} parent=0 // pred_fallthru
    _
  // Predicated region
  $region30: #{cox_pasnet_forward.1} parent=0 // pred_check
    _
  $region31: #{cox_pasnet_forward.1} parent=0 // pred_check_branch
    %37 = sbr.rel (0) target = $region33
  $region32: #{cox_pasnet_forward.1} parent=0 // pred_region
    _
  $region33: #{cox_pasnet_forward.1} parent=0 // pred_fallthru
    _
  // Predicated region
  $region34: #{cox_pasnet_forward.1} parent=0 // pred_check
    _
  $region35: #{cox_pasnet_forward.1} parent=0 // pred_check_branch
    %39 = sbr.rel (0) target = $region37
  $region36: #{cox_pasnet_forward.1} parent=0 // pred_region
    _
  $region37: #{cox_pasnet_forward.1} parent=0 // pred_fallthru
    _
  // Predicated region
  $region38: #{cox_pasnet_forward.1} parent=0 // pred_check
    _
  $region39: #{cox_pasnet_forward.1} parent=0 // pred_check_branch
    %41 = sbr.rel (0) target = $region41
  $region40: #{cox_pasnet_forward.1} parent=0 // pred_region
    _
  $region41: #{cox_pasnet_forward.1} parent=0 // pred_fallthru
    _
  // Predicated region
  $region42: #{cox_pasnet_forward.1} parent=0 // pred_check
    _
  $region43: #{cox_pasnet_forward.1} parent=0 // pred_check_branch
    %43 = sbr.rel (0) target = $region45
  $region44: #{cox_pasnet_forward.1} parent=0 // pred_region
    _
  $region45: #{cox_pasnet_forward.1} parent=0 // pred_fallthru
    _
  // Predicated region
  $region46: #{cox_pasnet_forward.1} parent=0 // pred_check
    _
  $region47: #{cox_pasnet_forward.1} parent=0 // pred_check_branch
    %45 = sbr.rel (0) target = $region49
  $region48: #{cox_pasnet_forward.1} parent=0 // pred_region
    _
  $region49: #{cox_pasnet_forward.1} parent=0 // pred_fallthru
    _
  // Predicated region
  $region50: #{cox_pasnet_forward.1} parent=0 // pred_check
    _
  $region51: #{cox_pasnet_forward.1} parent=0 // pred_check_branch
    %47 = sbr.rel (0) target = $region53
  $region52: #{cox_pasnet_forward.1} parent=0 // pred_region
    _
  $region53: #{cox_pasnet_forward.1} parent=0 // pred_fallthru
    _
  // Predicated region
  $region54: #{cox_pasnet_forward.1} parent=0 // pred_check
    _
  $region55: #{cox_pasnet_forward.1} parent=0 // pred_check_branch
    %49 = sbr.rel (0) target = $region57
  $region56: #{cox_pasnet_forward.1} parent=0 // pred_region
    _
  $region57: #{cox_pasnet_forward.1} parent=0 // pred_fallthru
    _
  // Predicated region
  $region58: #{cox_pasnet_forward.1} parent=0 // pred_check
    _
  $region59: #{cox_pasnet_forward.1} parent=0 // pred_check_branch
    %51 = sbr.rel (0) target = $region61
  $region60: #{cox_pasnet_forward.1} parent=0 // pred_region
    _
  $region61: #{cox_pasnet_forward.1} parent=0 // pred_fallthru
    _
  %v53 = vld [vmem:[%s0] sm:$0xf]
  %v54 = vld [vmem:[%s2] sm:$0xf]
  %v55 = vld [vmem:[%s2 + $0x4] sm:$0xf]
  %v56 = vld [vmem:[%s2 + $0x8] sm:$0xf]
  %v57 = vld [vmem:[%s2 + $0xc] sm:$0xf]
  %v58 = vld [vmem:[%s3] sm:$0x1]
  %v60 = vlaneseq
  %v61 = vshrl.u32 %v60, 7
  %v62 = vsub.s32 0, %v61
  %v63 = vrot.slane %v58, %v62
  %v69 = vunpack.c.l.b16 %v54
  %v70 = vunpack.c.l.b16 %v55
  %v71 = vunpack.c.l.b16 %v56
  %v72 = vunpack.c.l.b16 %v57
  %v73 = vpack.c.b16 %v70, %v69
  %v74 = vpack.c.b16 %v72, %v71
  %vm77 = vcmask 261120
  %v79 = vsel %vm77, %v53, 0
  %81 = vmatprep.subr.bf16.mxu0 0
  %82 = vmatpush1.bf16.msra.mxu0 %v73
  %83 = vmatprep.subr.bf16.mxu0 0
  %84 = vmatpush1.bf16.msra.mxu0 %v74
  %85 = vmatprep.subr.bf16.mxu0 0
  %86 = vmatpush1.bf16.msra.mxu0 0
  %87 = vmatprep.subr.bf16.mxu0 0
  %88 = vmatpush1.bf16.msra.mxu0 0
  %89 = vmatprep.subr.bf16.mxu0 0
  %90 = vmatpush1.bf16.msra.mxu0 0
  %91 = vmatprep.subr.bf16.mxu0 0
  %92 = vmatpush1.bf16.msra.mxu0 0
  %93 = vmatprep.subr.bf16.mxu0 0
  %94 = vmatpush1.bf16.msra.mxu0 0
  %95 = vmatprep.subr.bf16.mxu0 0
  %96 = vmatpush1.bf16.msra.mxu0 0
  %97 = vmatprep.subr.bf16.mxu0 0
  %98 = vmatpush1.bf16.msra.mxu0 0
  %99 = vmatprep.subr.bf16.mxu0 0
  %100 = vmatpush1.bf16.msra.mxu0 0
  %101 = vmatprep.subr.bf16.mxu0 0
  %102 = vmatpush1.bf16.msra.mxu0 0
  %103 = vmatprep.subr.bf16.mxu0 0
  %104 = vmatpush1.bf16.msra.mxu0 0
  %105 = vmatprep.subr.bf16.mxu0 0
  %106 = vmatpush1.bf16.msra.mxu0 0
  %107 = vmatprep.subr.bf16.mxu0 0
  %108 = vmatpush1.bf16.msra.mxu0 0
  %109 = vmatprep.subr.bf16.mxu0 0
  %110 = vmatpush1.bf16.msra.mxu0 0
  %111 = vmatprep.subr.bf16.mxu0 0
  %112 = vmatpush1.bf16.msra.mxu0 0
  %113 = vmatprep.mubr.bf16.mxu0 0
  %114 = vmatmul.mubr.bf16.gmra.mrb[0].mxu0 %v79
  %v115 = vpop.f32.mrb[0].mxu0
  %v116 = vadd.f32 %v63, %v115
  %v117 = vpop.f32.mrb[0].mxu0
  %v118 = vpop.f32.mrb[0].mxu0
  %v119 = vpop.f32.mrb[0].mxu0
  %120 = vdwg.mxu0
  %v121 = vtanh.pop %v116
  %v122 = vpack.c.bf16 %v121, %v121
  %v123 = vld [vmem:[%s4] sm:$0xf]
  %v124 = vld [vmem:[%s4 + $0x4] sm:$0xf]
  %v125 = vld [vmem:[%s5] sm:$0x1]
  %v127 = vlaneseq
  %v128 = vshrl.u32 %v127, 7
  %v129 = vsub.s32 0, %v128
  %v130 = vrot.slane %v125, %v129
  %v134 = vunpack.c.l.b16 %v123
  %v135 = vunpack.c.l.b16 %v124
  %v136 = vpack.c.b16 %v135, %v134
  %vm138 = vcmask 130048
  %v140 = vsel %vm138, %v122, 0
  %142 = vmatprep.subr.bf16.mxu0 0
  %143 = vmatpush1.bf16.msra.mxu0 %v136
  %144 = vmatprep.subr.bf16.mxu0 0
  %145 = vmatpush1.bf16.msra.mxu0 0
  %146 = vmatprep.subr.bf16.mxu0 0
  %147 = vmatpush1.bf16.msra.mxu0 0
  %148 = vmatprep.subr.bf16.mxu0 0
  %149 = vmatpush1.bf16.msra.mxu0 0
  %150 = vmatprep.subr.bf16.mxu0 0
  %151 = vmatpush1.bf16.msra.mxu0 0
  %152 = vmatprep.subr.bf16.mxu0 0
  %153 = vmatpush1.bf16.msra.mxu0 0
  %154 = vmatprep.subr.bf16.mxu0 0
  %155 = vmatpush1.bf16.msra.mxu0 0
  %156 = vmatprep.subr.bf16.mxu0 0
  %157 = vmatpush1.bf16.msra.mxu0 0
  %158 = vmatprep.subr.bf16.mxu0 0
  %159 = vmatpush1.bf16.msra.mxu0 0
  %160 = vmatprep.subr.bf16.mxu0 0
  %161 = vmatpush1.bf16.msra.mxu0 0
  %162 = vmatprep.subr.bf16.mxu0 0
  %163 = vmatpush1.bf16.msra.mxu0 0
  %164 = vmatprep.subr.bf16.mxu0 0
  %165 = vmatpush1.bf16.msra.mxu0 0
  %166 = vmatprep.subr.bf16.mxu0 0
  %167 = vmatpush1.bf16.msra.mxu0 0
  %168 = vmatprep.subr.bf16.mxu0 0
  %169 = vmatpush1.bf16.msra.mxu0 0
  %170 = vmatprep.subr.bf16.mxu0 0
  %171 = vmatpush1.bf16.msra.mxu0 0
  %172 = vmatprep.subr.bf16.mxu0 0
  %173 = vmatpush1.bf16.msra.mxu0 0
  %174 = vmatprep.mubr.bf16.mxu0 0
  %175 = vmatmul.mubr.bf16.gmra.mrb[0].mxu0 %v140
  %v176 = vpop.f32.mrb[0].mxu0
  %v177 = vadd.f32 %v130, %v176
  %v178 = vpop.f32.mrb[0].mxu0
  %v179 = vpop.f32.mrb[0].mxu0
  %v180 = vpop.f32.mrb[0].mxu0
  %181 = vdwg.mxu0
  %v182 = vtanh.pop %v177
  %v183 = vpack.c.bf16 %v182, %v182
  %v184 = vld [vmem:[%s6] sm:$0xf]
  %v185 = vld [vmem:[%s6 + $0x4] sm:$0xf]
  %v186 = vld [vmem:[%s7] sm:$0x1]
  %v188 = vlaneseq
  %v189 = vshrl.u32 %v188, 7
  %v190 = vsub.s32 0, %v189
  %v191 = vrot.slane %v186, %v190
  %v195 = vunpack.c.l.b16 %v184
  %v196 = vunpack.c.l.b16 %v185
  %v197 = vpack.c.b16 %v196, %v195
  %v200 = vsel %vm138, %v183, 0
  %202 = vmatprep.subr.bf16.mxu0 0
  %203 = vmatpush1.bf16.msra.mxu0 %v197
  %204 = vmatprep.subr.bf16.mxu0 0
  %205 = vmatpush1.bf16.msra.mxu0 0
  %206 = vmatprep.subr.bf16.mxu0 0
  %207 = vmatpush1.bf16.msra.mxu0 0
  %208 = vmatprep.subr.bf16.mxu0 0
  %209 = vmatpush1.bf16.msra.mxu0 0
  %210 = vmatprep.subr.bf16.mxu0 0
  %211 = vmatpush1.bf16.msra.mxu0 0
  %212 = vmatprep.subr.bf16.mxu0 0
  %213 = vmatpush1.bf16.msra.mxu0 0
  %214 = vmatprep.subr.bf16.mxu0 0
  %215 = vmatpush1.bf16.msra.mxu0 0
  %216 = vmatprep.subr.bf16.mxu0 0
  %217 = vmatpush1.bf16.msra.mxu0 0
  %218 = vmatprep.subr.bf16.mxu0 0
  %219 = vmatpush1.bf16.msra.mxu0 0
  %220 = vmatprep.subr.bf16.mxu0 0
  %221 = vmatpush1.bf16.msra.mxu0 0
  %222 = vmatprep.subr.bf16.mxu0 0
  %223 = vmatpush1.bf16.msra.mxu0 0
  %224 = vmatprep.subr.bf16.mxu0 0
  %225 = vmatpush1.bf16.msra.mxu0 0
  %226 = vmatprep.subr.bf16.mxu0 0
  %227 = vmatpush1.bf16.msra.mxu0 0
  %228 = vmatprep.subr.bf16.mxu0 0
  %229 = vmatpush1.bf16.msra.mxu0 0
  %230 = vmatprep.subr.bf16.mxu0 0
  %231 = vmatpush1.bf16.msra.mxu0 0
  %232 = vmatprep.subr.bf16.mxu0 0
  %233 = vmatpush1.bf16.msra.mxu0 0
  %234 = vmatprep.mubr.bf16.mxu0 0
  %235 = vmatmul.mubr.bf16.gmra.mrb[0].mxu0 %v200
  %v236 = vpop.f32.mrb[0].mxu0
  %v237 = vadd.f32 %v191, %v236
  %v238 = vpop.f32.mrb[0].mxu0
  %v239 = vpop.f32.mrb[0].mxu0
  %v240 = vpop.f32.mrb[0].mxu0
  %241 = vdwg.mxu0
  %v242 = vtanh.pop %v237
  %v243 = vpack.c.bf16 %v242, %v242
  %v244 = vld [vmem:[%s9] sm:$0xf]
  %v245 = vld [vmem:[%s10] sm:$0x1]
  %v247 = vlaneseq
  %v248 = vshrl.u32 %v247, 7
  %v249 = vsub.s32 0, %v248
  %v250 = vrot.slane %v245, %v249
  %vm252 = vcmask 64512
  %v254 = vsel %vm252, %v243, 0
  %vm256 = vcmask 1043456
  %v258 = vsel %vm256, %v244, 0
  %260 = vmatprep.subr.bf16.mxu0 0
  %261 = vmatpush1.bf16.msra.mxu0 %v258
  %262 = vmatprep.subr.bf16.mxu0 0
  %263 = vmatpush1.bf16.msra.mxu0 0
  %264 = vmatprep.subr.bf16.mxu0 0
  %265 = vmatpush1.bf16.msra.mxu0 0
  %266 = vmatprep.subr.bf16.mxu0 0
  %267 = vmatpush1.bf16.msra.mxu0 0
  %268 = vmatprep.subr.bf16.mxu0 0
  %269 = vmatpush1.bf16.msra.mxu0 0
  %270 = vmatprep.subr.bf16.mxu0 0
  %271 = vmatpush1.bf16.msra.mxu0 0
  %272 = vmatprep.subr.bf16.mxu0 0
  %273 = vmatpush1.bf16.msra.mxu0 0
  %274 = vmatprep.subr.bf16.mxu0 0
  %275 = vmatpush1.bf16.msra.mxu0 0
  %276 = vmatprep.subr.bf16.mxu0 0
  %277 = vmatpush1.bf16.msra.mxu0 0
  %278 = vmatprep.subr.bf16.mxu0 0
  %279 = vmatpush1.bf16.msra.mxu0 0
  %280 = vmatprep.subr.bf16.mxu0 0
  %281 = vmatpush1.bf16.msra.mxu0 0
  %282 = vmatprep.subr.bf16.mxu0 0
  %283 = vmatpush1.bf16.msra.mxu0 0
  %284 = vmatprep.subr.bf16.mxu0 0
  %285 = vmatpush1.bf16.msra.mxu0 0
  %286 = vmatprep.subr.bf16.mxu0 0
  %287 = vmatpush1.bf16.msra.mxu0 0
  %288 = vmatprep.subr.bf16.mxu0 0
  %289 = vmatpush1.bf16.msra.mxu0 0
  %290 = vmatprep.subr.bf16.mxu0 0
  %291 = vmatpush1.bf16.msra.mxu0 0
  %292 = vmatprep.mubr.bf16.mxu0 0
  %293 = vmatmul.mubr.bf16.gmra.mrb[0].mxu0 %v254
  %v294 = vpop.f32.mrb[0].mxu0
  %v295 = vadd.f32 %v250, %v294
  %v296 = vpop.f32.mrb[0].mxu0
  %v297 = vpop.f32.mrb[0].mxu0
  %v298 = vpop.f32.mrb[0].mxu0
  %299 = vdwg.mxu0
  %v300 = vtanh.pop %v295
  %v301 = vpack.c.bf16 %v300, %v300
  %v302 = vld [vmem:[%s11] sm:$0xf]
  %v303 = vld [vmem:[%s11 + $0x4] sm:$0xf]
  %v304 = vld [vmem:[%s12] sm:$0x1]
  %v306 = vlaneseq
  %v307 = vshrl.u32 %v306, 7
  %v308 = vsub.s32 0, %v307
  %v309 = vrot.slane %v304, %v308
  %v313 = vunpack.c.l.b16 %v302
  %v314 = vunpack.c.l.b16 %v303
  %v315 = vpack.c.b16 %v314, %v313
  %v318 = vsel %vm138, %v301, 0
  %320 = vmatprep.subr.bf16.mxu0 0
  %321 = vmatpush1.bf16.msra.mxu0 %v315
  %322 = vmatprep.subr.bf16.mxu0 0
  %323 = vmatpush1.bf16.msra.mxu0 0
  %324 = vmatprep.subr.bf16.mxu0 0
  %325 = vmatpush1.bf16.msra.mxu0 0
  %326 = vmatprep.subr.bf16.mxu0 0
  %327 = vmatpush1.bf16.msra.mxu0 0
  %328 = vmatprep.subr.bf16.mxu0 0
  %329 = vmatpush1.bf16.msra.mxu0 0
  %330 = vmatprep.subr.bf16.mxu0 0
  %331 = vmatpush1.bf16.msra.mxu0 0
  %332 = vmatprep.subr.bf16.mxu0 0
  %333 = vmatpush1.bf16.msra.mxu0 0
  %334 = vmatprep.subr.bf16.mxu0 0
  %335 = vmatpush1.bf16.msra.mxu0 0
  %336 = vmatprep.subr.bf16.mxu0 0
  %337 = vmatpush1.bf16.msra.mxu0 0
  %338 = vmatprep.subr.bf16.mxu0 0
  %339 = vmatpush1.bf16.msra.mxu0 0
  %340 = vmatprep.subr.bf16.mxu0 0
  %341 = vmatpush1.bf16.msra.mxu0 0
  %342 = vmatprep.subr.bf16.mxu0 0
  %343 = vmatpush1.bf16.msra.mxu0 0
  %344 = vmatprep.subr.bf16.mxu0 0
  %345 = vmatpush1.bf16.msra.mxu0 0
  %346 = vmatprep.subr.bf16.mxu0 0
  %347 = vmatpush1.bf16.msra.mxu0 0
  %348 = vmatprep.subr.bf16.mxu0 0
  %349 = vmatpush1.bf16.msra.mxu0 0
  %350 = vmatprep.subr.bf16.mxu0 0
  %351 = vmatpush1.bf16.msra.mxu0 0
  %352 = vmatprep.mubr.bf16.mxu0 0
  %353 = vmatmul.mubr.bf16.gmra.mrb[0].mxu0 %v318
  %v354 = vpop.f32.mrb[0].mxu0
  %v355 = vadd.f32 %v309, %v354
  %v356 = vpop.f32.mrb[0].mxu0
  %v357 = vpop.f32.mrb[0].mxu0
  %v358 = vpop.f32.mrb[0].mxu0
  %359 = vdwg.mxu0
  %v360 = vtanh.pop %v355
  %v361 = vpack.c.bf16 %v360, %v360
  %v362 = vld [vmem:[%s13] sm:$0xf]
  %v363 = vld [vmem:[%s13 + $0x4] sm:$0xf]
  %v364 = vld [vmem:[%s14] sm:$0x1]
  %v366 = vlaneseq
  %v367 = vshrl.u32 %v366, 7
  %v368 = vsub.s32 0, %v367
  %v369 = vrot.slane %v364, %v368
  %v373 = vunpack.c.l.b16 %v362
  %v374 = vunpack.c.l.b16 %v363
  %v375 = vpack.c.b16 %v374, %v373
  %v378 = vsel %vm138, %v361, 0
  %380 = vmatprep.subr.bf16.mxu0 0
  %381 = vmatpush1.bf16.msra.mxu0 %v375
  %382 = vmatprep.subr.bf16.mxu0 0
  %383 = vmatpush1.bf16.msra.mxu0 0
  %384 = vmatprep.subr.bf16.mxu0 0
  %385 = vmatpush1.bf16.msra.mxu0 0
  %386 = vmatprep.subr.bf16.mxu0 0
  %387 = vmatpush1.bf16.msra.mxu0 0
  %388 = vmatprep.subr.bf16.mxu0 0
  %389 = vmatpush1.bf16.msra.mxu0 0
  %390 = vmatprep.subr.bf16.mxu0 0
  %391 = vmatpush1.bf16.msra.mxu0 0
  %392 = vmatprep.subr.bf16.mxu0 0
  %393 = vmatpush1.bf16.msra.mxu0 0
  %394 = vmatprep.subr.bf16.mxu0 0
  %395 = vmatpush1.bf16.msra.mxu0 0
  %396 = vmatprep.subr.bf16.mxu0 0
  %397 = vmatpush1.bf16.msra.mxu0 0
  %398 = vmatprep.subr.bf16.mxu0 0
  %399 = vmatpush1.bf16.msra.mxu0 0
  %400 = vmatprep.subr.bf16.mxu0 0
  %401 = vmatpush1.bf16.msra.mxu0 0
  %402 = vmatprep.subr.bf16.mxu0 0
  %403 = vmatpush1.bf16.msra.mxu0 0
  %404 = vmatprep.subr.bf16.mxu0 0
  %405 = vmatpush1.bf16.msra.mxu0 0
  %406 = vmatprep.subr.bf16.mxu0 0
  %407 = vmatpush1.bf16.msra.mxu0 0
  %408 = vmatprep.subr.bf16.mxu0 0
  %409 = vmatpush1.bf16.msra.mxu0 0
  %410 = vmatprep.subr.bf16.mxu0 0
  %411 = vmatpush1.bf16.msra.mxu0 0
  %412 = vmatprep.mubr.bf16.mxu0 0
  %413 = vmatmul.mubr.bf16.gmra.mrb[0].mxu0 %v378
  %v414 = vpop.f32.mrb[0].mxu0
  %v415 = vadd.f32 %v369, %v414
  %v416 = vpop.f32.mrb[0].mxu0
  %v417 = vpop.f32.mrb[0].mxu0
  %v418 = vpop.f32.mrb[0].mxu0
  %419 = vdwg.mxu0
  %420 = vst.msk [vmem:[%s16] sm:$0xff] %vm77, %v415
  %v421 = vld [vmem:[%s8] sm:$0x1]
  %v423 = vlaneseq
  %v424 = vshrl.u32 %v423, 7
  %v425 = vsub.s32 0, %v424
  %v426 = vrot.slane %v421, %v425
  %v428 = vmul.f32 %v242, %v426
  %v429 = vsel %vm252, %v428, 0.0
  %430 = vadd.xlane.f32.xlu0 %v429
  %v431 = vpop.xlane.xlu0 %430
  %v432 = vld [vmem:[%s1] sm:$0xff]
  %v433 = vadd.f32 %v431, %v432
  %435 = vset.pattern.permute.xlu0 0
  %436 = vperm.xlu0 %435, %v433
  %v437 = vpop.permute.xlu0 %436
  %439 = vst [vmem:[%s15] sm:$0xff] %v437
  // Predicated region
  $region62: #{cox_pasnet_forward.1} parent=0 // pred_check
    _
  $region63: #{cox_pasnet_forward.1} parent=0 // pred_check_branch
    %441 = sbr.rel (0) target = $region65
  $region64: #{cox_pasnet_forward.1} parent=0 // pred_region
    _
  $region65: #{cox_pasnet_forward.1} parent=0 // pred_fallthru
    _
  // Predicated region
  $region66: #{cox_pasnet_forward.1} parent=0 // pred_check
    _
  $region67: #{cox_pasnet_forward.1} parent=0 // pred_check_branch
    %443 = sbr.rel (0) target = $region69
  $region68: #{cox_pasnet_forward.1} parent=0 // pred_region
    _
  $region69: #{cox_pasnet_forward.1} parent=0 // pred_fallthru
    _
  // Predicated region
  $region70: #{cox_pasnet_forward.1} parent=0 // pred_check
    _
  $region71: #{cox_pasnet_forward.1} parent=0 // pred_check_branch
    %445 = sbr.rel (0) target = $region73
  $region72: #{cox_pasnet_forward.1} parent=0 // pred_region
    _
  $region73: #{cox_pasnet_forward.1} parent=0 // pred_fallthru
    _
  // Predicated region
  $region74: #{cox_pasnet_forward.1} parent=0 // pred_check
    _
  $region75: #{cox_pasnet_forward.1} parent=0 // pred_check_branch
    %447 = sbr.rel (0) target = $region77
  $region76: #{cox_pasnet_forward.1} parent=0 // pred_region
    _
  $region77: #{cox_pasnet_forward.1} parent=0 // pred_fallthru
    _

</llo_original>
